<compile_context>
chip_gen: v5e
topology: v5e:2x2
jax: 0.10.0
libtpu: 0.0.40
codegen_flags: <defaults>
</compile_context>

<pallas_src>
import math

import jax
import jax.numpy as jnp
import numpy as np
from jax.experimental import pallas as pl
from jax.experimental.pallas import tpu as pltpu


def _round_up(a, b):
    return (a + b - 1) // b * b


def _cdiv(a, b):
    return (a + b - 1) // b


def _make_kernel(*, K, pad, Ch, T, T_TILE, HALO, has_halo, ragged):
    def kernel(*refs):
        if has_halo:
            x_ref, xh_ref, dw_ref, pw_ref, b_ref, o_ref = refs
        else:
            x_ref, dw_ref, pw_ref, b_ref, o_ref = refs

        def glu(v):
            v = v.astype(jnp.float32)
            # For Ch % 128 == 0 this split lands on vreg (lane-tile) boundaries and is free.
            # For narrow Ch (test config) it costs a few relayout ops; accepted instead of a
            # wrapper-side split, which would re-copy x and double HBM traffic (mem-bound kernel).
            return v[:, :Ch] * jax.nn.sigmoid(v[:, Ch:])

        # ---- GLU on the main time tile ----
        y = glu(x_ref[0])                                   # (T_TILE, Ch) f32

        if ragged:
            # Last time tile can hang past T: zero the invalid rows so the depthwise taps of the
            # valid rows near the ragged edge do not pick up the block's out-of-bounds garbage.
            valid = T - pl.program_id(1) * T_TILE
            row = jax.lax.broadcasted_iota(jnp.int32, (T_TILE, 1), 0)
            y = jnp.where(row < valid, y, 0.0)

        dw = dw_ref[...].astype(jnp.float32)                # (K, Ch), loaded once, reused per tap

        # ---- depthwise conv along T (boundary zeros come from the halo side array) ----
        if not has_halo:                                    # K == 1: single aligned tap, no halo
            z = y * dw[0]
        else:
            yh = glu(xh_ref[0, 0])                          # (2*HALO, Ch): [8 rows before | 8 after]
            # y_full[e] == GLU(x)[t0 - HALO + e], zeros outside [0, T)
            y_full = jnp.concatenate([yh[:HALO], y, yh[HALO:]], axis=0)   # (T_TILE + 2*HALO, Ch)
            z = None
            for k in range(K):                              # K is static -> unrolled
                start = HALO - pad + k
                # TODO(synk): a pltpu.roll per tap would push this sublane shift onto the XLU slot;
                # kept as static slices to avoid depending on the roll direction convention.
                term = y_full[start:start + T_TILE, :] * dw[k]
                z = term if z is None else z + term

        # ---- pointwise (1x1) conv on the MXU + bias (f32 accumulation) ----
        o = jnp.dot(z.astype(pw_ref.dtype), pw_ref[...],
                    preferred_element_type=jnp.float32)
        o = o + b_ref[...].astype(jnp.float32)
        o_ref[0] = o.astype(o_ref.dtype)

    return kernel


def liteconv_pallas(x, depthwise_weight, pointwise_weight, bias, *,
                    t_tile=512, mxu_bf16=None,
                    vmem_limit_bytes=32 * 1024 * 1024):
    B, T, C = x.shape
    Ch = C // 2
    K = depthwise_weight.shape[1]
    pad = K // 2
    assert C % 2 == 0
    assert K % 2 == 1, "only odd kernel sizes give 'same' output length (padding = K // 2)"

    # ---- time tiling: large tiles for the HBM roofline, but enough grid steps for the DMA
    # pipeline and for v7x's two TensorCores when B*T is small. ----
    T_TILE = _round_up(min(t_tile, _round_up(T, 8)), 8)
    MIN_STEPS = 8
    if B * _cdiv(T, T_TILE) < MIN_STEPS:
        T_TILE = max(8, _round_up(_cdiv(T, _cdiv(MIN_STEPS, B)), 8))
    nt = _cdiv(T, T_TILE)
    ragged = (T % T_TILE) != 0          # ragged last tile handled in-kernel; no T padding, no slice
    has_halo = pad > 0
    HALO = _round_up(max(pad, 1), 8)    # sublane-aligned halo depth (8 for any K <= 17)

    # ---- tiny halo side array: the HALO rows before and after every tile (zeros outside [0, T)).
    # This replaces the old full zero-padded copy of x; x itself streams straight from HBM. ----
    extra_args = []
    if has_halo:
        starts = np.arange(nt)[:, None] * T_TILE
        li = starts - HALO + np.arange(HALO)[None, :]        # rows just before each tile
        ri = starts + T_TILE + np.arange(HALO)[None, :]      # rows just after each tile
        idx = np.concatenate([li, ri], axis=1)               # (nt, 2*HALO)
        valid = jnp.asarray((idx >= 0) & (idx < T))
        idx_c = jnp.asarray(np.clip(idx, 0, T - 1))
        x_halo = jnp.where(valid[None, :, :, None], x[:, idx_c, :],
                           jnp.zeros((), x.dtype))           # (B, nt, 2*HALO, C)
        extra_args.append(x_halo)

    # bf16 MXU operands only when the model dtype is already bf16, or explicitly requested
    # (v6e/v7x option); GLU / depthwise math stays f32 (v5e-safe, negligible for mem-bound shapes).
    if mxu_bf16 is None:
        mxu_bf16 = x.dtype == jnp.bfloat16
    mxu_dtype = jnp.bfloat16 if mxu_bf16 else jnp.float32

    dw_t = depthwise_weight.T                                # (K, Ch) lane-friendly taps
    pw_t = pointwise_weight.T.astype(mxu_dtype)              # (Ch, Ch): o = z @ pw.T
    b2 = bias.reshape(1, Ch)

    kernel = _make_kernel(K=K, pad=pad, Ch=Ch, T=T, T_TILE=T_TILE, HALO=HALO,
                          has_halo=has_halo, ragged=ragged)

    cost = pl.CostEstimate(
        flops=int(B * T * (2 * Ch * Ch + 2 * K * Ch + 3 * Ch)),
        transcendentals=int(B * T * Ch),
        bytes_accessed=int(x.dtype.itemsize * (x.size + B * T * Ch
                                               + (B * nt * 2 * HALO * C if has_halo else 0))
                           + 4 * (dw_t.size + Ch * Ch + Ch)),
    )

    x_spec = pl.BlockSpec((1, T_TILE, C), lambda b, t: (b, t, 0))
    halo_spec = pl.BlockSpec((1, 1, 2 * HALO, C), lambda b, t: (b, t, 0, 0))
    out_spec = pl.BlockSpec((1, T_TILE, Ch), lambda b, t: (b, t, 0))

    def _call(weight_mode):
        kw = {} if weight_mode is None else {"pipeline_mode": weight_mode}
        w_specs = [
            pl.BlockSpec((K, Ch), lambda b, t: (0, 0), **kw),
            pl.BlockSpec((Ch, Ch), lambda b, t: (0, 0), **kw),
            pl.BlockSpec((1, Ch), lambda b, t: (0, 0), **kw),
        ]
        in_specs = [x_spec] + ([halo_spec] if has_halo else []) + w_specs
        return pl.pallas_call(
            kernel,
            out_shape=jax.ShapeDtypeStruct((B, T, Ch), x.dtype),
            grid=(B, nt),
            in_specs=in_specs,
            out_specs=out_spec,
            compiler_params=pltpu.CompilerParams(
                dimension_semantics=("parallel", "parallel"),
                vmem_limit_bytes=vmem_limit_bytes,
            ),
            cost_estimate=cost,
        )(x, *extra_args, dw_t, pw_t, b2)

    # Grid-invariant weights / bias only need a single VMEM buffer (saves Ch^2*dtype of VMEM per
    # weight; matters for large Ch on v7x).  Fall back to default double-buffering if this jax's
    # TPU lowering does not accept pipeline_mode.
    if hasattr(pl, "Buffered"):
        try:
            return _call(pl.Buffered(1))
        except Exception:
            pass  # TODO(synk): pipeline_mode unsupported here; weights keep default double buffers
    return _call(None)


def liteconv_ref(x, dw, pw, bias):
    """Pure-JAX reference of the implemented semantics."""
    B, T, C = x.shape
    Ch = C // 2
    a, g = x[..., :Ch], x[..., Ch:]
    y = a * jax.nn.sigmoid(g)
    K = dw.shape[1]
    pad = K // 2
    y_pad = jnp.pad(y, ((0, 0), (pad, K - 1 - pad), (0, 0)))
    z = jnp.zeros_like(y)
    for k in range(K):
        z = z + y_pad[:, k:k + T, :] * dw[:, k][None, None, :]
    o = jnp.einsum("btc,oc->bto", z, pw) + bias[None, None, :]
    return o


def xavier_uniform(key, shape):
    fan_out, fan_in = shape[0], shape[1]
    bound = math.sqrt(6.0 / (fan_in + fan_out))
    return jax.random.uniform(key, shape, jnp.float32, minval=-bound, maxval=bound)


if __name__ == "__main__":
    # args: d_model=32, n_heads=4, liteconv_kernel_size=3, liteconv_weight_dropout=0.0
    B, T, d_model, K = 2, 16, 32, 3
    Ch = d_model // 2

    key = jax.random.PRNGKey(0)
    k_x, k_dw, k_pw, k_x2 = jax.random.split(key, 4)

    x = jax.random.normal(k_x, (B, T, d_model), jnp.float32)
    depthwise_weight = xavier_uniform(k_dw, (Ch, K))          # (d_model//2, kernel_size)
    pointwise_weight = xavier_uniform(k_pw, (Ch, Ch))         # (d_model//2, d_model//2)
    bias = jnp.zeros((Ch,), jnp.float32)                      # nn.init.zeros_

    # small-T path: auto-shrunk tiles, multi-tile grid, halo across the tile boundary
    out = liteconv_pallas(x, depthwise_weight, pointwise_weight, bias)
    out = jax.block_until_ready(out)
    ref = liteconv_ref(x, depthwise_weight, pointwise_weight, bias)
    assert out.shape == (B, T, Ch)
    assert jnp.allclose(out, ref, atol=1e-5, rtol=1e-5), "mismatch vs reference (single batch tile)"

    # ragged multi-tile path (T % T_TILE != 0): exercises halo handling + in-kernel row masking
    T2 = 40
    x2 = jax.random.normal(k_x2, (B, T2, d_model), jnp.float32)
    out2 = liteconv_pallas(x2, depthwise_weight, pointwise_weight, bias, t_tile=16)
    out2 = jax.block_until_ready(out2)
    ref2 = liteconv_ref(x2, depthwise_weight, pointwise_weight, bias)
    assert out2.shape == (B, T2, Ch)
    assert jnp.allclose(out2, ref2, atol=1e-5, rtol=1e-5), "mismatch vs reference (ragged tiles)"

    print("KERNEL_OK")
</pallas_src>

<mosaic_0001>
module attributes {stable_mosaic.version = 11 : i64} {
  func.func @kernel(%arg0: i32, %arg1: i32, %arg2: memref<1x8x32xf32, #tpu.memory_space<vmem>>, %arg3: memref<1x1x16x32xf32, #tpu.memory_space<vmem>>, %arg4: memref<3x16xf32, #tpu.memory_space<vmem>>, %arg5: memref<16x16xf32, #tpu.memory_space<vmem>>, %arg6: memref<1x16xf32, #tpu.memory_space<vmem>>, %arg7: memref<1x8x16xf32, #tpu.memory_space<vmem>>) attributes {dimension_semantics = [#tpu.dimension_semantics<parallel>, #tpu.dimension_semantics<parallel>], iteration_bounds = array<i64: 2, 2>, scalar_prefetch = 0 : i64, scratch_operands = 0 : i64, tpu.core_type = #tpu.core_type<tc>, window_params = [{transform_indices = @transform_0, window_bounds = array<i64: 1, 8, 32>}, {transform_indices = @transform_1, window_bounds = array<i64: 1, 1, 16, 32>}, {pipeline_mode = #tpu.pipeline_mode<synchronous>, transform_indices = @transform_2, window_bounds = array<i64: 3, 16>}, {pipeline_mode = #tpu.pipeline_mode<synchronous>, transform_indices = @transform_3, window_bounds = array<i64: 16, 16>}, {pipeline_mode = #tpu.pipeline_mode<synchronous>, transform_indices = @transform_4, window_bounds = array<i64: 1, 16>}, {transform_indices = @transform_5, window_bounds = array<i64: 1, 8, 16>}]} {
    %c0 = arith.constant 0 : index
    %c0_0 = arith.constant 0 : index
    %c0_1 = arith.constant 0 : index
    %0 = vector.load %arg2[%c0, %c0_0, %c0_1] : memref<1x8x32xf32, #tpu.memory_space<vmem>>, vector<1x8x32xf32>
    %1 = vector.shape_cast %0 : vector<1x8x32xf32> to vector<8x32xf32>
    %2 = vector.extract_strided_slice %1 {offsets = [0, 0], sizes = [8, 16], strides = [1, 1]} : vector<8x32xf32> to vector<8x16xf32>
    %3 = vector.extract_strided_slice %1 {offsets = [0, 16], sizes = [8, 16], strides = [1, 1]} : vector<8x32xf32> to vector<8x16xf32>
    %4 = arith.negf %3 : vector<8x16xf32>
    %5 = math.exp %4 : vector<8x16xf32>
    %cst = arith.constant 1.000000e+00 : f32
    %6 = vector.broadcast %cst : f32 to vector<8x16xf32>
    %7 = arith.addf %6, %5 : vector<8x16xf32>
    %8 = arith.divf %6, %7 : vector<8x16xf32>
    %9 = arith.mulf %2, %8 : vector<8x16xf32>
    %c0_2 = arith.constant 0 : index
    %c0_3 = arith.constant 0 : index
    %10 = vector.load %arg4[%c0_2, %c0_3] : memref<3x16xf32, #tpu.memory_space<vmem>>, vector<3x16xf32>
    %c0_4 = arith.constant 0 : index
    %c0_5 = arith.constant 0 : index
    %c0_6 = arith.constant 0 : index
    %c0_7 = arith.constant 0 : index
    %11 = vector.load %arg3[%c0_4, %c0_5, %c0_6, %c0_7] : memref<1x1x16x32xf32, #tpu.memory_space<vmem>>, vector<1x1x16x32xf32>
    %12 = vector.shape_cast %11 : vector<1x1x16x32xf32> to vector<16x32xf32>
    %13 = vector.extract_strided_slice %12 {offsets = [0, 0], sizes = [16, 16], strides = [1, 1]} : vector<16x32xf32> to vector<16x16xf32>
    %14 = vector.extract_strided_slice %12 {offsets = [0, 16], sizes = [16, 16], strides = [1, 1]} : vector<16x32xf32> to vector<16x16xf32>
    %15 = arith.negf %14 : vector<16x16xf32>
    %16 = math.exp %15 : vector<16x16xf32>
    %cst_8 = arith.constant 1.000000e+00 : f32
    %17 = vector.broadcast %cst_8 : f32 to vector<16x16xf32>
    %18 = arith.addf %17, %16 : vector<16x16xf32>
    %19 = arith.divf %17, %18 : vector<16x16xf32>
    %20 = arith.mulf %13, %19 : vector<16x16xf32>
    %21 = vector.extract_strided_slice %20 {offsets = [0, 0], sizes = [8, 16], strides = [1, 1]} : vector<16x16xf32> to vector<8x16xf32>
    %22 = vector.extract_strided_slice %20 {offsets = [8, 0], sizes = [8, 16], strides = [1, 1]} : vector<16x16xf32> to vector<8x16xf32>
    %23 = tpu.concatenate %21, %9, %22 in 0 : vector<8x16xf32>, vector<8x16xf32>, vector<8x16xf32> -> vector<24x16xf32>
    %24 = vector.extract_strided_slice %23 {offsets = [7, 0], sizes = [8, 16], strides = [1, 1]} : vector<24x16xf32> to vector<8x16xf32>
    %25 = vector.extract_strided_slice %10 {offsets = [0, 0], sizes = [1, 16], strides = [1, 1]} : vector<3x16xf32> to vector<1x16xf32>
    %26 = vector.shape_cast %25 : vector<1x16xf32> to vector<16xf32>
    %27 = vector.shape_cast %26 : vector<16xf32> to vector<1x16xf32>
    %28 = vector.broadcast %27 : vector<1x16xf32> to vector<8x16xf32>
    %29 = arith.mulf %24, %28 : vector<8x16xf32>
    %30 = vector.extract_strided_slice %23 {offsets = [8, 0], sizes = [8, 16], strides = [1, 1]} : vector<24x16xf32> to vector<8x16xf32>
    %31 = vector.extract_strided_slice %10 {offsets = [1, 0], sizes = [1, 16], strides = [1, 1]} : vector<3x16xf32> to vector<1x16xf32>
    %32 = vector.shape_cast %31 : vector<1x16xf32> to vector<16xf32>
    %33 = vector.shape_cast %32 : vector<16xf32> to vector<1x16xf32>
    %34 = vector.broadcast %33 : vector<1x16xf32> to vector<8x16xf32>
    %35 = arith.mulf %30, %34 : vector<8x16xf32>
    %36 = arith.addf %29, %35 : vector<8x16xf32>
    %37 = vector.extract_strided_slice %23 {offsets = [9, 0], sizes = [8, 16], strides = [1, 1]} : vector<24x16xf32> to vector<8x16xf32>
    %38 = vector.extract_strided_slice %10 {offsets = [2, 0], sizes = [1, 16], strides = [1, 1]} : vector<3x16xf32> to vector<1x16xf32>
    %39 = vector.shape_cast %38 : vector<1x16xf32> to vector<16xf32>
    %40 = vector.shape_cast %39 : vector<16xf32> to vector<1x16xf32>
    %41 = vector.broadcast %40 : vector<1x16xf32> to vector<8x16xf32>
    %42 = arith.mulf %37, %41 : vector<8x16xf32>
    %43 = arith.addf %36, %42 : vector<8x16xf32>
    %c0_9 = arith.constant 0 : index
    %c0_10 = arith.constant 0 : index
    %44 = vector.load %arg5[%c0_9, %c0_10] : memref<16x16xf32, #tpu.memory_space<vmem>>, vector<16x16xf32>
    %cst_11 = arith.constant dense<0.000000e+00> : vector<8x16xf32>
    %45 = tpu.matmul %43, %44, %cst_11 {dimension_numbers = #tpu.dot_dimension_numbers<[1], [0], [0], [1], [0, 0, 1, 1], [], []>} : vector<8x16xf32>, vector<16x16xf32>, vector<8x16xf32> -> vector<8x16xf32>
    %c0_12 = arith.constant 0 : index
    %c0_13 = arith.constant 0 : index
    %46 = vector.load %arg6[%c0_12, %c0_13] : memref<1x16xf32, #tpu.memory_space<vmem>>, vector<1x16xf32>
    %47 = vector.broadcast %46 : vector<1x16xf32> to vector<8x16xf32>
    %48 = arith.addf %45, %47 : vector<8x16xf32>
    %c0_14 = arith.constant 0 : index
    %c0_15 = arith.constant 0 : index
    %c0_16 = arith.constant 0 : index
    %49 = vector.load %arg7[%c0_14, %c0_15, %c0_16] : memref<1x8x16xf32, #tpu.memory_space<vmem>>, vector<1x8x16xf32>
    %50 = vector.shape_cast %49 : vector<1x8x16xf32> to vector<8x16xf32>
    %51 = vector.shape_cast %48 : vector<8x16xf32> to vector<1x8x16xf32>
    tpu.vector_store %arg7[%c0_14, %c0_15, %c0_16], %51 {strides = array<i32>} : memref<1x8x16xf32, #tpu.memory_space<vmem>>, vector<1x8x16xf32>,
    return
  }
  func.func @transform_0(%arg0: i32, %arg1: i32) -> (i32, i32, i32) {
    %c0_i32 = arith.constant 0 : i32
    %c0_i32_0 = arith.constant 0 : i32
    return %arg0, %arg1, %c0_i32 : i32, i32, i32
  }
  func.func @transform_1(%arg0: i32, %arg1: i32) -> (i32, i32, i32, i32) {
    %c0_i32 = arith.constant 0 : i32
    %c0_i32_0 = arith.constant 0 : i32
    %c0_i32_1 = arith.constant 0 : i32
    return %arg0, %arg1, %c0_i32, %c0_i32_0 : i32, i32, i32, i32
  }
  func.func @transform_2(%arg0: i32, %arg1: i32) -> (i32, i32) {
    %c0_i32 = arith.constant 0 : i32
    %c0_i32_0 = arith.constant 0 : i32
    %c0_i32_1 = arith.constant 0 : i32
    return %c0_i32, %c0_i32_0 : i32, i32
  }
  func.func @transform_3(%arg0: i32, %arg1: i32) -> (i32, i32) {
    %c0_i32 = arith.constant 0 : i32
    %c0_i32_0 = arith.constant 0 : i32
    %c0_i32_1 = arith.constant 0 : i32
    return %c0_i32, %c0_i32_0 : i32, i32
  }
  func.func @transform_4(%arg0: i32, %arg1: i32) -> (i32, i32) {
    %c0_i32 = arith.constant 0 : i32
    %c0_i32_0 = arith.constant 0 : i32
    %c0_i32_1 = arith.constant 0 : i32
    return %c0_i32, %c0_i32_0 : i32, i32
  }
  func.func @transform_5(%arg0: i32, %arg1: i32) -> (i32, i32, i32) {
    %c0_i32 = arith.constant 0 : i32
    %c0_i32_0 = arith.constant 0 : i32
    return %arg0, %arg1, %c0_i32 : i32, i32, i32
  }
}

module attributes {stable_mosaic.version = 11 : i64} {
  func.func @kernel(%arg0: i32, %arg1: i32, %arg2: memref<1x8x32xf32, #tpu.memory_space<vmem>>, %arg3: memref<1x1x16x32xf32, #tpu.memory_space<vmem>>, %arg4: memref<3x16xf32, #tpu.memory_space<vmem>>, %arg5: memref<16x16xf32, #tpu.memory_space<vmem>>, %arg6: memref<1x16xf32, #tpu.memory_space<vmem>>, %arg7: memref<1x8x16xf32, #tpu.memory_space<vmem>>) attributes {dimension_semantics = [#tpu.dimension_semantics<parallel>, #tpu.dimension_semantics<parallel>], iteration_bounds = array<i64: 2, 2>, scalar_prefetch = 0 : i64, scratch_operands = 0 : i64, tpu.core_type = #tpu.core_type<tc>, window_params = [{transform_indices = @transform_0, window_bounds = array<i64: 1, 8, 32>}, {transform_indices = @transform_1, window_bounds = array<i64: 1, 1, 16, 32>}, {pipeline_mode = #tpu.pipeline_mode<synchronous>, transform_indices = @transform_2, window_bounds = array<i64: 3, 16>}, {pipeline_mode = #tpu.pipeline_mode<synchronous>, transform_indices = @transform_3, window_bounds = array<i64: 16, 16>}, {pipeline_mode = #tpu.pipeline_mode<synchronous>, transform_indices = @transform_4, window_bounds = array<i64: 1, 16>}, {transform_indices = @transform_5, window_bounds = array<i64: 1, 8, 16>}]} {
    %c0 = arith.constant 0 : index
    %c0_0 = arith.constant 0 : index
    %c0_1 = arith.constant 0 : index
    %0 = vector.load %arg2[%c0, %c0_0, %c0_1] : memref<1x8x32xf32, #tpu.memory_space<vmem>>, vector<1x8x32xf32>
    %1 = vector.shape_cast %0 : vector<1x8x32xf32> to vector<8x32xf32>
    %2 = vector.extract_strided_slice %1 {offsets = [0, 0], sizes = [8, 16], strides = [1, 1]} : vector<8x32xf32> to vector<8x16xf32>
    %3 = vector.extract_strided_slice %1 {offsets = [0, 16], sizes = [8, 16], strides = [1, 1]} : vector<8x32xf32> to vector<8x16xf32>
    %4 = arith.negf %3 : vector<8x16xf32>
    %5 = math.exp %4 : vector<8x16xf32>
    %cst = arith.constant 1.000000e+00 : f32
    %6 = vector.broadcast %cst : f32 to vector<8x16xf32>
    %7 = arith.addf %6, %5 : vector<8x16xf32>
    %8 = arith.divf %6, %7 : vector<8x16xf32>
    %9 = arith.mulf %2, %8 : vector<8x16xf32>
    %c0_2 = arith.constant 0 : index
    %c0_3 = arith.constant 0 : index
    %10 = vector.load %arg4[%c0_2, %c0_3] : memref<3x16xf32, #tpu.memory_space<vmem>>, vector<3x16xf32>
    %c0_4 = arith.constant 0 : index
    %c0_5 = arith.constant 0 : index
    %c0_6 = arith.constant 0 : index
    %c0_7 = arith.constant 0 : index
    %11 = vector.load %arg3[%c0_4, %c0_5, %c0_6, %c0_7] : memref<1x1x16x32xf32, #tpu.memory_space<vmem>>, vector<1x1x16x32xf32>
    %12 = vector.shape_cast %11 : vector<1x1x16x32xf32> to vector<16x32xf32>
    %13 = vector.extract_strided_slice %12 {offsets = [0, 0], sizes = [16, 16], strides = [1, 1]} : vector<16x32xf32> to vector<16x16xf32>
    %14 = vector.extract_strided_slice %12 {offsets = [0, 16], sizes = [16, 16], strides = [1, 1]} : vector<16x32xf32> to vector<16x16xf32>
    %15 = arith.negf %14 : vector<16x16xf32>
    %16 = math.exp %15 : vector<16x16xf32>
    %cst_8 = arith.constant 1.000000e+00 : f32
    %17 = vector.broadcast %cst_8 : f32 to vector<16x16xf32>
    %18 = arith.addf %17, %16 : vector<16x16xf32>
    %19 = arith.divf %17, %18 : vector<16x16xf32>
    %20 = arith.mulf %13, %19 : vector<16x16xf32>
    %21 = vector.extract_strided_slice %20 {offsets = [0, 0], sizes = [8, 16], strides = [1, 1]} : vector<16x16xf32> to vector<8x16xf32>
    %22 = vector.extract_strided_slice %20 {offsets = [8, 0], sizes = [8, 16], strides = [1, 1]} : vector<16x16xf32> to vector<8x16xf32>
    %23 = tpu.concatenate %21, %9, %22 in 0 : vector<8x16xf32>, vector<8x16xf32>, vector<8x16xf32> -> vector<24x16xf32>
    %24 = vector.extract_strided_slice %23 {offsets = [7, 0], sizes = [8, 16], strides = [1, 1]} : vector<24x16xf32> to vector<8x16xf32>
    %25 = vector.extract_strided_slice %10 {offsets = [0, 0], sizes = [1, 16], strides = [1, 1]} : vector<3x16xf32> to vector<1x16xf32>
    %26 = vector.shape_cast %25 : vector<1x16xf32> to vector<16xf32>
    %27 = vector.shape_cast %26 : vector<16xf32> to vector<1x16xf32>
    %28 = vector.broadcast %27 : vector<1x16xf32> to vector<8x16xf32>
    %29 = arith.mulf %24, %28 : vector<8x16xf32>
    %30 = vector.extract_strided_slice %23 {offsets = [8, 0], sizes = [8, 16], strides = [1, 1]} : vector<24x16xf32> to vector<8x16xf32>
    %31 = vector.extract_strided_slice %10 {offsets = [1, 0], sizes = [1, 16], strides = [1, 1]} : vector<3x16xf32> to vector<1x16xf32>
    %32 = vector.shape_cast %31 : vector<1x16xf32> to vector<16xf32>
    %33 = vector.shape_cast %32 : vector<16xf32> to vector<1x16xf32>
    %34 = vector.broadcast %33 : vector<1x16xf32> to vector<8x16xf32>
    %35 = arith.mulf %30, %34 : vector<8x16xf32>
    %36 = arith.addf %29, %35 : vector<8x16xf32>
    %37 = vector.extract_strided_slice %23 {offsets = [9, 0], sizes = [8, 16], strides = [1, 1]} : vector<24x16xf32> to vector<8x16xf32>
    %38 = vector.extract_strided_slice %10 {offsets = [2, 0], sizes = [1, 16], strides = [1, 1]} : vector<3x16xf32> to vector<1x16xf32>
    %39 = vector.shape_cast %38 : vector<1x16xf32> to vector<16xf32>
    %40 = vector.shape_cast %39 : vector<16xf32> to vector<1x16xf32>
    %41 = vector.broadcast %40 : vector<1x16xf32> to vector<8x16xf32>
    %42 = arith.mulf %37, %41 : vector<8x16xf32>
    %43 = arith.addf %36, %42 : vector<8x16xf32>
    %c0_9 = arith.constant 0 : index
    %c0_10 = arith.constant 0 : index
    %44 = vector.load %arg5[%c0_9, %c0_10] : memref<16x16xf32, #tpu.memory_space<vmem>>, vector<16x16xf32>
    %cst_11 = arith.constant dense<0.000000e+00> : vector<8x16xf32>
    %45 = tpu.matmul %43, %44, %cst_11 {dimension_numbers = #tpu.dot_dimension_numbers<[1], [0], [0], [1], [0, 0, 1, 1], [], []>} : vector<8x16xf32>, vector<16x16xf32>, vector<8x16xf32> -> vector<8x16xf32>
    %c0_12 = arith.constant 0 : index
    %c0_13 = arith.constant 0 : index
    %46 = vector.load %arg6[%c0_12, %c0_13] : memref<1x16xf32, #tpu.memory_space<vmem>>, vector<1x16xf32>
    %47 = vector.broadcast %46 : vector<1x16xf32> to vector<8x16xf32>
    %48 = arith.addf %45, %47 : vector<8x16xf32>
    %c0_14 = arith.constant 0 : index
    %c0_15 = arith.constant 0 : index
    %c0_16 = arith.constant 0 : index
    %49 = vector.load %arg7[%c0_14, %c0_15, %c0_16] : memref<1x8x16xf32, #tpu.memory_space<vmem>>, vector<1x8x16xf32>
    %50 = vector.shape_cast %49 : vector<1x8x16xf32> to vector<8x16xf32>
    %51 = vector.shape_cast %48 : vector<8x16xf32> to vector<1x8x16xf32>
    tpu.vector_store %arg7[%c0_14, %c0_15, %c0_16], %51 {strides = array<i32>} : memref<1x8x16xf32, #tpu.memory_space<vmem>>, vector<1x8x16xf32>,
    return
  }
  func.func @transform_0(%arg0: i32, %arg1: i32) -> (i32, i32, i32) {
    %c0_i32 = arith.constant 0 : i32
    %c0_i32_0 = arith.constant 0 : i32
    return %arg0, %arg1, %c0_i32 : i32, i32, i32
  }
  func.func @transform_1(%arg0: i32, %arg1: i32) -> (i32, i32, i32, i32) {
    %c0_i32 = arith.constant 0 : i32
    %c0_i32_0 = arith.constant 0 : i32
    %c0_i32_1 = arith.constant 0 : i32
    return %arg0, %arg1, %c0_i32, %c0_i32_0 : i32, i32, i32, i32
  }
  func.func @transform_2(%arg0: i32, %arg1: i32) -> (i32, i32) {
    %c0_i32 = arith.constant 0 : i32
    %c0_i32_0 = arith.constant 0 : i32
    %c0_i32_1 = arith.constant 0 : i32
    return %c0_i32, %c0_i32_0 : i32, i32
  }
  func.func @transform_3(%arg0: i32, %arg1: i32) -> (i32, i32) {
    %c0_i32 = arith.constant 0 : i32
    %c0_i32_0 = arith.constant 0 : i32
    %c0_i32_1 = arith.constant 0 : i32
    return %c0_i32, %c0_i32_0 : i32, i32
  }
  func.func @transform_4(%arg0: i32, %arg1: i32) -> (i32, i32) {
    %c0_i32 = arith.constant 0 : i32
    %c0_i32_0 = arith.constant 0 : i32
    %c0_i32_1 = arith.constant 0 : i32
    return %c0_i32, %c0_i32_0 : i32, i32
  }
  func.func @transform_5(%arg0: i32, %arg1: i32) -> (i32, i32, i32) {
    %c0_i32 = arith.constant 0 : i32
    %c0_i32_0 = arith.constant 0 : i32
    return %arg0, %arg1, %c0_i32 : i32, i32, i32
  }
}

</mosaic_0001>

<llo_original>
// kernel: tpu_custom_call.1
$region0: #{tpu_custom_call.1}
  #allocation0 [shape = 'u32[]', space=smem, size = 0x4, offset = 0x4, fixed_abs, tag = 'smem constant byte address 0x4 - core index']
  #allocation1 [shape = 'u32[72,128]{1,0:T(1,128)}', space=vmem, size = 0x9000, scoped, tag = 'internal scratch']
  %s0 = inlined_call_operand.hbm [shape: f32[2,16,32], index: 0, kind: input, shape index: {}]
  %s1 = inlined_call_operand.hbm [shape: f32[2,2,16,32], index: 1, kind: input, shape index: {}]
  %s2 = inlined_call_operand.hbm [shape: f32[3,16], index: 2, kind: input, shape index: {}]
  %s3 = inlined_call_operand.hbm [shape: f32[16,16], index: 3, kind: input, shape index: {}]
  %s4 = inlined_call_operand.vmem [shape: f32[1,16], index: 4, kind: input, shape index: {}]
  %s5 = inlined_call_operand.hbm [shape: f32[2,16,16], index: 5, kind: output, shape index: {}]
  %s6 = sld [smem:[#allocation0]]
  $region69: #{tpu_custom_call.1} parent=0
    _
  %s8 = ssub.s32 1, %s6
  %s9 = scalar_select 0, %s8, %s6
  $region1: #{tpu_custom_call.1} parent=0
    #allocation2 [shape = 'u8[8192]{0}', space=vmem, size = 0x2000, scoped, tag = 'input window, operand 0']
    #allocation3 [shape = 's32[2]{0}', space=sflag, size = 0x8, scoped, tag = 'scoped memory for tpu_custom_call.1']
    #allocation4 [shape = 's32[2]{0}', space=sflag, size = 0x8, scoped, tag = 'scoped memory for tpu_custom_call.1']
    #allocation5 [shape = 'u8[16384]{0}', space=vmem, size = 0x4000, scoped, tag = 'input window, operand 1']
    #allocation6 [shape = 's32[2]{0}', space=sflag, size = 0x8, scoped, tag = 'scoped memory for tpu_custom_call.1']
    #allocation7 [shape = 'u8[2048]{0}', space=vmem, size = 0x800, scoped, tag = 'input window, operand 2, single buffered']
    #allocation8 [shape = 'u8[8192]{0}', space=vmem, size = 0x2000, scoped, tag = 'input window, operand 3, single buffered']
    #allocation9 [shape = 's32[1]{0}', space=sflag, size = 0x4, scoped, tag = 'scoped memory for tpu_custom_call.1']
    #allocation10 [shape = 'u8[8192]{0}', space=vmem, size = 0x2000, scoped, tag = 'output window, operand 0']
    %10 = vsyncpa [#allocation3], 0
    %s11 = scalar_lea.sflag [#allocation3], 1
    %12 = vsyncpa %s11, 0
    %13 = vsyncpa [#allocation6], 0
    %s14 = scalar_lea.sflag [#allocation6], 1
    %15 = vsyncpa %s14, 0
    %16 = vsyncpa [#allocation9], 0
    %17 = vsyncpa [#allocation4], 0
    %s18 = scalar_lea.sflag [#allocation4], 1
    %19 = vsyncpa %s18, 0
    loop: start=0, step=1, limit=6
    $region2: #{tpu_custom_call.1} parent=1 // loop_pre_header
      _
    $region3: #{tpu_custom_call.1} parent=1 // loop_header
      %s21 = sphi 0, %s25
      %p22 = scmp.ge.s32.totalorder %s21, 6
      %s28 = sphi 0, %s40
      %s29 = sphi 0, %s36
      %s30 = sphi 0, %s28
      %s31 = sphi 0, %s29
      %s32 = sphi 0, %s30
      %s33 = sphi 0, %s31
      %s45 = sphi 0, %s47
      %s48 = sphi 0, %s45
      %s49 = sphi 0, %s48
      %s65 = sphi 0, %s49
      %s73 = sphi 0, %s75
      %s76 = sphi 0, %s73
      %s77 = sphi 0, %s76
      %s93 = sphi 0, %s77
      %s97 = sphi 0, %s97
      %s99 = sphi 0, %s97
      %s100 = sphi 0, %s99
      %s114 = sphi 0, %s100
      %s118 = sphi 0, %s118
      %s120 = sphi 0, %s118
      %s121 = sphi 0, %s120
      %s135 = sphi 0, %s121
      %s139 = sphi 0, %s139
      %s141 = sphi 0, %s139
      %s142 = sphi 0, %s141
      %s156 = sphi 0, %s142
      %s164 = sphi 0, %s166
      %s167 = sphi 0, %s164
      %s168 = sphi 0, %s167
      %s184 = sphi 0, %s168
    $region4: #{tpu_custom_call.1} parent=1 // loop_header_branch
      %24 = sbr.rel (%p22) target = $region8
    $region5: #{tpu_custom_call.1} parent=1 // loop_body
      %s26 = ssub.s32 %s21, 1
      %s27 = ssub.s32 %s21, 2
      %s34 = sadd.s32 1, %s29
      %p35 = scmp.ge.s32.totalorder %s34, 2
      %s36 = scalar_select %p35, 0, %s34
      %s37 = sadd.s32 1, %s28
      %s38 = scalar_select %p35, %s37, %s28
      %p39 = scmp.ge.s32.totalorder %s38, 2
      %s40 = scalar_select %p39, 0, %s38
      %s41 = ssub.s32 %s28, %s40
      %s42 = ssub.s32 %s29, %s36
      %s43 = sor.u32 %s41, %s42
      %p44 = scmp.eq.s32.totalorder %s43, 0
      %s46 = sadd.s32 %s45, 1
      %s47 = scalar_select %p44, %s45, %s46
      %p50 = pneg %p44
      %p51 = scmp.eq.s32.totalorder %s21, 3
      %p52 = por %p50, %p51
      %p53 = scmp.ne.s32.totalorder %s45, %s48
      %p54 = scmp.eq.s32.totalorder %s21, 0
      %p55 = por %p53, %p54
      %p56 = scmp.ne.s32.totalorder %s45, %s48
      %p57 = scmp.eq.s32.totalorder %s26, 3
      %p58 = por %p56, %p57
      %p59 = scmp.ne.s32.totalorder %s48, %s49
      %p60 = scmp.eq.s32.totalorder %s26, 0
      %p61 = por %p59, %p60
      %p62 = scmp.ne.s32.totalorder %s48, %s49
      %p63 = scmp.eq.s32.totalorder %s27, 3
      %p64 = por %p62, %p63
      %p66 = scmp.ne.s32.totalorder %s49, %s65
      %p67 = scmp.eq.s32.totalorder %s27, 0
      %p68 = por %p66, %p67
      %s69 = ssub.s32 %s28, %s40
      %s70 = ssub.s32 %s29, %s36
      %s71 = sor.u32 %s69, %s70
      %p72 = scmp.eq.s32.totalorder %s71, 0
      %s74 = sadd.s32 %s73, 1
      %s75 = scalar_select %p72, %s73, %s74
      %p78 = pneg %p72
      %p79 = scmp.eq.s32.totalorder %s21, 3
      %p80 = por %p78, %p79
      %p81 = scmp.ne.s32.totalorder %s73, %s76
      %p82 = scmp.eq.s32.totalorder %s21, 0
      %p83 = por %p81, %p82
      %p84 = scmp.ne.s32.totalorder %s73, %s76
      %p85 = scmp.eq.s32.totalorder %s26, 3
      %p86 = por %p84, %p85
      %p87 = scmp.ne.s32.totalorder %s76, %s77
      %p88 = scmp.eq.s32.totalorder %s26, 0
      %p89 = por %p87, %p88
      %p90 = scmp.ne.s32.totalorder %s76, %s77
      %p91 = scmp.eq.s32.totalorder %s27, 3
      %p92 = por %p90, %p91
      %p94 = scmp.ne.s32.totalorder %s77, %s93
      %p95 = scmp.eq.s32.totalorder %s27, 0
      %p96 = por %p94, %p95
      %s98 = sadd.s32 %s97, 1
      %p101 = scmp.eq.s32.totalorder %s21, 3
      %p102 = scmp.ne.s32.totalorder %s97, %s99
      %p103 = scmp.eq.s32.totalorder %s21, 0
      %p104 = por %p102, %p103
      %p105 = scmp.ne.s32.totalorder %s97, %s99
      %p106 = scmp.eq.s32.totalorder %s26, 3
      %p107 = por %p105, %p106
      %p108 = scmp.ne.s32.totalorder %s99, %s100
      %p109 = scmp.eq.s32.totalorder %s26, 0
      %p110 = por %p108, %p109
      %p111 = scmp.ne.s32.totalorder %s99, %s100
      %p112 = scmp.eq.s32.totalorder %s27, 3
      %p113 = por %p111, %p112
      %p115 = scmp.ne.s32.totalorder %s100, %s114
      %p116 = scmp.eq.s32.totalorder %s27, 0
      %p117 = por %p115, %p116
      %s119 = sadd.s32 %s118, 1
      %p122 = scmp.eq.s32.totalorder %s21, 3
      %p123 = scmp.ne.s32.totalorder %s118, %s120
      %p124 = scmp.eq.s32.totalorder %s21, 0
      %p125 = por %p123, %p124
      %p126 = scmp.ne.s32.totalorder %s118, %s120
      %p127 = scmp.eq.s32.totalorder %s26, 3
      %p128 = por %p126, %p127
      %p129 = scmp.ne.s32.totalorder %s120, %s121
      %p130 = scmp.eq.s32.totalorder %s26, 0
      %p131 = por %p129, %p130
      %p132 = scmp.ne.s32.totalorder %s120, %s121
      %p133 = scmp.eq.s32.totalorder %s27, 3
      %p134 = por %p132, %p133
      %p136 = scmp.ne.s32.totalorder %s121, %s135
      %p137 = scmp.eq.s32.totalorder %s27, 0
      %p138 = por %p136, %p137
      %s140 = sadd.s32 %s139, 1
      %p143 = scmp.eq.s32.totalorder %s21, 3
      %p144 = scmp.ne.s32.totalorder %s139, %s141
      %p145 = scmp.eq.s32.totalorder %s21, 0
      %p146 = por %p144, %p145
      %p147 = scmp.ne.s32.totalorder %s139, %s141
      %p148 = scmp.eq.s32.totalorder %s26, 3
      %p149 = por %p147, %p148
      %p150 = scmp.ne.s32.totalorder %s141, %s142
      %p151 = scmp.eq.s32.totalorder %s26, 0
      %p152 = por %p150, %p151
      %p153 = scmp.ne.s32.totalorder %s141, %s142
      %p154 = scmp.eq.s32.totalorder %s27, 3
      %p155 = por %p153, %p154
      %p157 = scmp.ne.s32.totalorder %s142, %s156
      %p158 = scmp.eq.s32.totalorder %s27, 0
      %p159 = por %p157, %p158
      %s160 = ssub.s32 %s28, %s40
      %s161 = ssub.s32 %s29, %s36
      %s162 = sor.u32 %s160, %s161
      %p163 = scmp.eq.s32.totalorder %s162, 0
      %s165 = sadd.s32 %s164, 1
      %s166 = scalar_select %p163, %s164, %s165
      %p169 = pneg %p163
      %p170 = scmp.eq.s32.totalorder %s21, 3
      %p171 = por %p169, %p170
      %p172 = scmp.ne.s32.totalorder %s164, %s167
      %p173 = scmp.eq.s32.totalorder %s21, 0
      %p174 = por %p172, %p173
      %p175 = scmp.ne.s32.totalorder %s164, %s167
      %p176 = scmp.eq.s32.totalorder %s26, 3
      %p177 = por %p175, %p176
      %p178 = scmp.ne.s32.totalorder %s167, %s168
      %p179 = scmp.eq.s32.totalorder %s26, 0
      %p180 = por %p178, %p179
      %p181 = scmp.ne.s32.totalorder %s167, %s168
      %p182 = scmp.eq.s32.totalorder %s27, 3
      %p183 = por %p181, %p182
      %p185 = scmp.ne.s32.totalorder %s168, %s184
      %p186 = scmp.eq.s32.totalorder %s27, 0
      %p187 = por %p185, %p186
      %p188 = scmp.le.s32.totalorder 1, %s21
      %p189 = scmp.lt.s32.totalorder %s21, 5
      %p190 = pnand %p188, %p189
      %p191 = pneg %p190
      // Predicated region
      $region9: #{tpu_custom_call.1} parent=5 // pred_check
        _
      $region10: #{tpu_custom_call.1} parent=5 // pred_check_branch
        %193 = sbr.rel (%p190) target = $region12
      $region11: #{tpu_custom_call.1} parent=5 // pred_region
        %s194 = ssub.s32 %s21, 1
        // Predicated region
        $region13: #{tpu_custom_call.1} parent=11 // pred_check
          %p195 = pneg %p110
        $region14: #{tpu_custom_call.1} parent=11 // pred_check_branch
          %197 = sbr.rel (%p195) target = $region16
        $region15: #{tpu_custom_call.1} parent=11 // pred_region
          %199 = vsyncadd [#allocation6], 0
          %s201 = sshll.u32 %s2, 4
          %s202 = int_to_ptr.hbm [resolvable:$true] %s201
          %s203 = sshll.u32 [#allocation7], 4
          %s204 = int_to_ptr.vmem [resolvable:$true] %s203
          %206 = dma.hbm_to_vmem [thread:$0]  %s202, 64, %s204, [#allocation6]
        $region16: #{tpu_custom_call.1} parent=11 // pred_fallthru
          _
        // Predicated region
        $region17: #{tpu_custom_call.1} parent=11 // pred_check
          %p207 = pneg %p131
        $region18: #{tpu_custom_call.1} parent=11 // pred_check_branch
          %209 = sbr.rel (%p207) target = $region20
        $region19: #{tpu_custom_call.1} parent=11 // pred_region
          %211 = vsyncadd [#allocation9], 0
          %s212 = sshll.u32 %s3, 4
          %s213 = int_to_ptr.hbm [resolvable:$true] %s212
          %s214 = sshll.u32 [#allocation8], 4
          %s215 = int_to_ptr.vmem [resolvable:$true] %s214
          %220 = dma.hbm_to_vmem [thread:$0]  %s213, 256, %s215, [#allocation9], 128, 128, 8
        $region20: #{tpu_custom_call.1} parent=11 // pred_fallthru
          _
        // Predicated region
        $region21: #{tpu_custom_call.1} parent=11 // pred_check
          %p221 = pneg %p152
        $region22: #{tpu_custom_call.1} parent=11 // pred_check_branch
          %223 = sbr.rel (%p221) target = $region24
        $region23: #{tpu_custom_call.1} parent=11 // pred_region
          _
        $region24: #{tpu_custom_call.1} parent=11 // pred_fallthru
          _
      $region12: #{tpu_custom_call.1} parent=5 // pred_fallthru
        _
      %p224 = scmp.lt.s32.totalorder %s21, 4
      // Predicated region
      $region25: #{tpu_custom_call.1} parent=5 // pred_check
        %p225 = pneg %p224
      $region26: #{tpu_custom_call.1} parent=5 // pred_check_branch
        %227 = sbr.rel (%p225) target = $region28
      $region27: #{tpu_custom_call.1} parent=5 // pred_region
        // Predicated region
        $region29: #{tpu_custom_call.1} parent=27 // pred_check
          %p228 = pneg %p55
        $region30: #{tpu_custom_call.1} parent=27 // pred_check_branch
          %230 = sbr.rel (%p228) target = $region32
        $region31: #{tpu_custom_call.1} parent=27 // pred_region
          %s231 = sand.u32 %s45, 1
          %s232 = scalar_lea.sflag [#allocation3], %s231
          %s233 = sand.u32 %s45, 1
          %s234 = smul.addr %s233, 8
          %s235 = scalar_lea.vmem [#allocation2], %s234
          %237 = vsyncadd %s232, 0
          %s238 = smul.addr %s28, 2
          %s239 = sadd.s32 %s29, %s238
          %s240 = smul.addr %s239, 8
          %s241 = scalar_lea.hbm %s0, %s240
          %s243 = sshll.u32 %s241, 4
          %s244 = int_to_ptr.hbm [resolvable:$true] %s243
          %s245 = sshll.u32 %s235, 4
          %s246 = int_to_ptr.vmem [resolvable:$true] %s245
          %248 = dma.hbm_to_vmem [thread:$0]  %s244, 128, %s246, %s232
        $region32: #{tpu_custom_call.1} parent=27 // pred_fallthru
          _
        // Predicated region
        $region33: #{tpu_custom_call.1} parent=27 // pred_check
          %p249 = pneg %p83
        $region34: #{tpu_custom_call.1} parent=27 // pred_check_branch
          %251 = sbr.rel (%p249) target = $region36
        $region35: #{tpu_custom_call.1} parent=27 // pred_region
          %s252 = sand.u32 %s21, 1
          %s253 = scalar_lea.sflag [#allocation6], %s252
          %s254 = sand.u32 %s73, 1
          %s255 = smul.addr %s254, 16
          %s256 = scalar_lea.vmem [#allocation5], %s255
          %258 = vsyncadd %s253, 0
          %s259 = smul.addr %s29, 2
          %s260 = smul.addr %s28, 4
          %s261 = sadd.s32 %s259, %s260
          %s262 = smul.addr %s261, 8
          %s263 = scalar_lea.hbm %s1, %s262
          %s264 = sshll.u32 %s263, 4
          %s265 = int_to_ptr.hbm [resolvable:$true] %s264
          %s266 = sshll.u32 %s256, 4
          %s267 = int_to_ptr.vmem [resolvable:$true] %s266
          %272 = dma.hbm_to_vmem [thread:$0]  %s265, 256, %s267, %s253, 128, 128, 8
        $region36: #{tpu_custom_call.1} parent=27 // pred_fallthru
          _
      $region28: #{tpu_custom_call.1} parent=5 // pred_fallthru
        _
      %p273 = scmp.le.s32.totalorder 1, %s21
      %p274 = scmp.lt.s32.totalorder %s21, 5
      %p275 = pnand %p273, %p274
      %p276 = pneg %p275
      // Predicated region
      $region37: #{tpu_custom_call.1} parent=5 // pred_check
        _
      $region38: #{tpu_custom_call.1} parent=5 // pred_check_branch
        %278 = sbr.rel (%p275) target = $region40
      $region39: #{tpu_custom_call.1} parent=5 // pred_region
        %s279 = ssub.s32 %s21, 1
        %s280 = sand.u32 %s48, 1
        %s281 = scalar_lea.sflag [#allocation3], %s280
        %s282 = sand.u32 %s48, 1
        %s283 = smul.addr %s282, 8
        %s284 = scalar_lea.vmem [#allocation2], %s283
        // Predicated region
        $region41: #{tpu_custom_call.1} parent=39 // pred_check
          %p285 = pneg %p61
        $region42: #{tpu_custom_call.1} parent=39 // pred_check_branch
          %287 = sbr.rel (%p285) target = $region44
        $region43: #{tpu_custom_call.1} parent=39 // pred_region
          %289 = dma.done %s281, 128
        $region44: #{tpu_custom_call.1} parent=39 // pred_fallthru
          _
        %s290 = sand.u32 %s26, 1
        %s291 = scalar_lea.sflag [#allocation6], %s290
        %s292 = sand.u32 %s76, 1
        %s293 = smul.addr %s292, 16
        %s294 = scalar_lea.vmem [#allocation5], %s293
        // Predicated region
        $region45: #{tpu_custom_call.1} parent=39 // pred_check
          %p295 = pneg %p89
        $region46: #{tpu_custom_call.1} parent=39 // pred_check_branch
          %297 = sbr.rel (%p295) target = $region48
        $region47: #{tpu_custom_call.1} parent=39 // pred_region
          %299 = dma.done %s291, 256
        $region48: #{tpu_custom_call.1} parent=39 // pred_fallthru
          _
        // Predicated region
        $region49: #{tpu_custom_call.1} parent=39 // pred_check
          %p300 = pneg %p110
        $region50: #{tpu_custom_call.1} parent=39 // pred_check_branch
          %302 = sbr.rel (%p300) target = $region52
        $region51: #{tpu_custom_call.1} parent=39 // pred_region
          %304 = dma.done [#allocation6], 64
        $region52: #{tpu_custom_call.1} parent=39 // pred_fallthru
          _
        // Predicated region
        $region53: #{tpu_custom_call.1} parent=39 // pred_check
          %p305 = pneg %p131
        $region54: #{tpu_custom_call.1} parent=39 // pred_check_branch
          %307 = sbr.rel (%p305) target = $region56
        $region55: #{tpu_custom_call.1} parent=39 // pred_region
          %309 = dma.done [#allocation9], 256
        $region56: #{tpu_custom_call.1} parent=39 // pred_fallthru
          _
        %s310 = sand.u32 %s48, 1
        %s311 = scalar_lea.sflag [#allocation3], %s310
        %s312 = sand.u32 %s48, 1
        %s313 = smul.addr %s312, 8
        %s314 = scalar_lea.vmem [#allocation2], %s313
        %p315 = pneg %p61
        %p316 = pneg %p58
        %s317 = sand.u32 %s26, 1
        %s318 = scalar_lea.sflag [#allocation6], %s317
        %s319 = sand.u32 %s76, 1
        %s320 = smul.addr %s319, 16
        %s321 = scalar_lea.vmem [#allocation5], %s320
        %p322 = pneg %p89
        %p323 = pneg %p86
        %p324 = pneg %p110
        %p325 = pneg %p107
        %p326 = pneg %p131
        %p327 = pneg %p128
        %p328 = pneg %p152
        %p329 = pneg %p149
        %p330 = pneg %p180
        %p331 = pneg %p177
        %s332 = sand.u32 %s167, 1
        %s333 = scalar_lea.sflag [#allocation4], %s332
        %s334 = sand.u32 %s167, 1
        %s335 = smul.addr %s334, 8
        %s336 = scalar_lea.vmem [#allocation10], %s335
        %v337 = vld [vmem:[%s284] sm:$0xff]
        %v338 = vxor.u32 %v337, 2147483648
        %v339 = vmul.f32 %v338, 1.442695
        %v340 = vpow.pop %v339
        %v341 = vadd.f32 %v340, 1.0
        %v342 = vrcp.pop %v341
        %v343 = vmul.f32 %v341, %v342
        %v344 = vsub.f32 1.0, %v343
        %v345 = vmul.f32 %v342, %v344
        %v346 = vadd.f32 %v342, %v345
        %vm347 = vweird.f32 %v341
        %vm348 = vweird.f32 %v342
        %vm349 = vmor %vm347, %vm348
        %v350 = vsel %vm349, %v342, %v346
        %v351 = vand.u32 2147483647, %v341
        %vm352 = vcmp.eq.f32.partialorder %v351, 8.507059e+37
        %v353 = vand.u32 %v341, 2147483648
        %v354 = vor.u32 1.1754944e-38, %v353
        %v355 = vsel %vm352, %v354, %v350
        %v356 = vmul.f32 1.0, %v355
        %358 = vrot.lane.b32.xlu0 %v356, 112
        %v359 = vpop.permute.xlu0 %358
        %v361 = vmul.f32 %v337, %v359
        %v362 = vld [vmem:[#allocation7] sm:$0x7]
        %v363 = vld [vmem:[%s294] sm:$0xff]
        %v364 = vld [vmem:[%s294 + $0x8] sm:$0xff]
        %v365 = vxor.u32 %v363, 2147483648
        %v366 = vxor.u32 %v364, 2147483648
        %v367 = vmul.f32 %v365, 1.442695
        %v368 = vpow.pop %v367
        %v369 = vmul.f32 %v366, 1.442695
        %v370 = vpow.pop %v369
        %v371 = vadd.f32 %v368, 1.0
        %v372 = vadd.f32 %v370, 1.0
        %v373 = vrcp.pop %v371
        %v374 = vmul.f32 %v371, %v373
        %v375 = vsub.f32 1.0, %v374
        %v376 = vmul.f32 %v373, %v375
        %v377 = vadd.f32 %v373, %v376
        %vm378 = vweird.f32 %v371
        %vm379 = vweird.f32 %v373
        %vm380 = vmor %vm378, %vm379
        %v381 = vsel %vm380, %v373, %v377
        %v382 = vand.u32 2147483647, %v371
        %vm383 = vcmp.eq.f32.partialorder %v382, 8.507059e+37
        %v384 = vand.u32 %v371, 2147483648
        %v385 = vor.u32 1.1754944e-38, %v384
        %v386 = vsel %vm383, %v385, %v381
        %v387 = vmul.f32 1.0, %v386
        %v388 = vrcp.pop %v372
        %v389 = vmul.f32 %v372, %v388
        %v390 = vsub.f32 1.0, %v389
        %v391 = vmul.f32 %v388, %v390
        %v392 = vadd.f32 %v388, %v391
        %vm393 = vweird.f32 %v372
        %vm394 = vweird.f32 %v388
        %vm395 = vmor %vm393, %vm394
        %v396 = vsel %vm395, %v388, %v392
        %v397 = vand.u32 2147483647, %v372
        %vm398 = vcmp.eq.f32.partialorder %v397, 8.507059e+37
        %v399 = vand.u32 %v372, 2147483648
        %v400 = vor.u32 1.1754944e-38, %v399
        %v401 = vsel %vm398, %v400, %v396
        %v402 = vmul.f32 1.0, %v401
        %405 = vrot.lane.b32.xlu0 %v387, 112
        %v406 = vpop.permute.xlu0 %405
        %407 = vrot.lane.b32.xlu0 %v402, 112
        %v408 = vpop.permute.xlu0 %407
        %v411 = vmul.f32 %v363, %v406
        %v412 = vmul.f32 %v364, %v408
        %v413 = vperm.slane %v362, 0
        %v414 = vmul.f32 %v411, %v413
        %v415 = vmul.f32 %v361, %v413
        %v416 = vperm.slane %v362, 1
        %v417 = vmul.f32 %v361, %v416
        %v419 = vrot.slane %v417, 1
        %v421 = vadd.f32 %v414, %v419
        %v422 = vadd.f32 %v415, %v419
        %v423 = vperm.slane %v362, 2
        %v424 = vmul.f32 %v361, %v423
        %v425 = vmul.f32 %v412, %v423
        %vm428 = vcmask 1045504
        %v429 = vrot.slane %v424, 2
        %v430 = vrot.slane %v425, 2
        %v431 = vsel %vm428, %v429, %v430
        %v434 = vadd.f32 %v421, %v429
        %v435 = vadd.f32 %v422, %v431
        %v436 = vld [vmem:[#allocation8] sm:$0xff]
        %v437 = vld [vmem:[#allocation8 + $0x8] sm:$0xff]
        %v438 = vld [vmem:[%s4] sm:$0x1]
        %v440 = vperm.slane %v438, 0
        %vm444 = vcmask 1040384
        %v445 = vrot.slane %v434, 7
        %v446 = vrot.slane %v435, 7
        %v447 = vsel %vm444, %v445, %v446
        %vm448 = vcmask 130048
        %v449 = vsel %vm448, %v447, 0
        %451 = vmatpush.msra.mxu0 0.0
        %452 = vmatpush.msra.mxu0 0.0
        %453 = vmatpush.msra.mxu0 0.0
        %454 = vmatpush.msra.mxu0 0.0
        %455 = vmatpush.msra.mxu0 0.0
        %456 = vmatpush.msra.mxu0 0.0
        %457 = vmatpush.msra.mxu0 0.0
        %458 = vmatpush.msra.mxu0 0.0
        %459 = vmatpush.msra.mxu0 0.0
        %460 = vmatpush.msra.mxu0 0.0
        %461 = vmatpush.msra.mxu0 0.0
        %462 = vmatpush.msra.mxu0 0.0
        %463 = vmatpush.msra.mxu0 0.0
        %464 = vmatpush.msra.mxu0 0.0
        %465 = vmatpush.msra.mxu0 %v437
        %466 = vmatpush.msra.mxu0 %v436
        %467 = vmatmul.f32.gmra.mxu0 %v449
        %v468 = vpop.f32.mrf.mxu0
        %v469 = vadd.f32 %v440, %v468
        %470 = vdwg.mxu0
        %471 = vst.msk [vmem:[%s336] sm:$0xff] %vm448, %v469
        %s472 = sand.u32 %s167, 1
        %s473 = scalar_lea.sflag [#allocation4], %s472
        %s474 = sand.u32 %s167, 1
        %s475 = smul.addr %s474, 8
        %s476 = scalar_lea.vmem [#allocation10], %s475
        // Predicated region
        $region57: #{tpu_custom_call.1} parent=39 // pred_check
          %p477 = pneg %p177
        $region58: #{tpu_custom_call.1} parent=39 // pred_check_branch
          %479 = sbr.rel (%p477) target = $region60
        $region59: #{tpu_custom_call.1} parent=39 // pred_region
          %481 = vsyncadd %s473, 0
          %s482 = smul.addr %s30, 2
          %s483 = sadd.s32 %s31, %s482
          %s484 = smul.addr %s483, 8
          %s485 = scalar_lea.hbm %s5, %s484
          %s487 = sshll.u32 %s476, 4
          %s488 = int_to_ptr.vmem [resolvable:$true] %s487
          %s489 = sshll.u32 %s485, 4
          %s490 = int_to_ptr.hbm [resolvable:$true] %s489
          %492 = dma.vmem_to_hbm [thread:$0]  %s488, 128, %s490, %s473
        $region60: #{tpu_custom_call.1} parent=39 // pred_fallthru
          _
      $region40: #{tpu_custom_call.1} parent=5 // pred_fallthru
        _
      %p493 = scmp.le.s32.totalorder 2, %s21
      // Predicated region
      $region61: #{tpu_custom_call.1} parent=5 // pred_check
        %p494 = pneg %p493
      $region62: #{tpu_custom_call.1} parent=5 // pred_check_branch
        %496 = sbr.rel (%p494) target = $region64
      $region63: #{tpu_custom_call.1} parent=5 // pred_region
        %s497 = ssub.s32 %s21, 2
        // Predicated region
        $region65: #{tpu_custom_call.1} parent=63 // pred_check
          %p498 = pneg %p183
        $region66: #{tpu_custom_call.1} parent=63 // pred_check_branch
          %500 = sbr.rel (%p498) target = $region68
        $region67: #{tpu_custom_call.1} parent=63 // pred_region
          %s501 = sand.u32 %s168, 1
          %s502 = scalar_lea.sflag [#allocation4], %s501
          %s503 = sand.u32 %s168, 1
          %s504 = smul.addr %s503, 8
          %s505 = scalar_lea.vmem [#allocation10], %s504
          %507 = dma.done %s502, 128
        $region68: #{tpu_custom_call.1} parent=63 // pred_fallthru
          _
      $region64: #{tpu_custom_call.1} parent=5 // pred_fallthru
        _
    $region6: #{tpu_custom_call.1} parent=1 // loop_footer
      %s25 = sadd.s32 1, %s21
    $region7: #{tpu_custom_call.1} parent=1 // loop_footer_branch
      %20 = sbr.rel target = $region3
    $region8: #{tpu_custom_call.1} parent=1 // loop_exit
      _
    %508 = vsyncpa [#allocation3], 1
    %s509 = scalar_lea.sflag [#allocation3], 1
    %510 = vsyncpa %s509, 1
    %511 = vsyncpa [#allocation6], 1
    %s512 = scalar_lea.sflag [#allocation6], 1
    %513 = vsyncpa %s512, 1
    %514 = vsyncpa [#allocation9], 1
    %515 = vsyncpa [#allocation4], 1
    %s516 = scalar_lea.sflag [#allocation4], 1
    %517 = vsyncpa %s516, 1

// kernel: tpu_custom_call.1
$region0: #{tpu_custom_call.1}
  #allocation0 [shape = 'u32[]', space=smem, size = 0x4, offset = 0x4, fixed_abs, tag = 'smem constant byte address 0x4 - core index']
  #allocation1 [shape = 'u32[72,128]{1,0:T(1,128)}', space=vmem, size = 0x9000, scoped, tag = 'internal scratch']
  %s0 = inlined_call_operand.hbm [shape: f32[2,16,32], index: 0, kind: input, shape index: {}]
  %s1 = inlined_call_operand.hbm [shape: f32[2,2,16,32], index: 1, kind: input, shape index: {}]
  %s2 = inlined_call_operand.hbm [shape: f32[3,16], index: 2, kind: input, shape index: {}]
  %s3 = inlined_call_operand.hbm [shape: f32[16,16], index: 3, kind: input, shape index: {}]
  %s4 = inlined_call_operand.vmem [shape: f32[1,16], index: 4, kind: input, shape index: {}]
  %s5 = inlined_call_operand.hbm [shape: f32[2,16,16], index: 5, kind: output, shape index: {}]
  %s6 = sld [smem:[#allocation0]]
  $region69: #{tpu_custom_call.1} parent=0
    _
  %s8 = ssub.s32 1, %s6
  %s9 = scalar_select 0, %s8, %s6
  $region1: #{tpu_custom_call.1} parent=0
    #allocation2 [shape = 'u8[8192]{0}', space=vmem, size = 0x2000, scoped, tag = 'input window, operand 0']
    #allocation3 [shape = 's32[2]{0}', space=sflag, size = 0x8, scoped, tag = 'scoped memory for tpu_custom_call.1']
    #allocation4 [shape = 's32[2]{0}', space=sflag, size = 0x8, scoped, tag = 'scoped memory for tpu_custom_call.1']
    #allocation5 [shape = 'u8[16384]{0}', space=vmem, size = 0x4000, scoped, tag = 'input window, operand 1']
    #allocation6 [shape = 's32[2]{0}', space=sflag, size = 0x8, scoped, tag = 'scoped memory for tpu_custom_call.1']
    #allocation7 [shape = 'u8[2048]{0}', space=vmem, size = 0x800, scoped, tag = 'input window, operand 2, single buffered']
    #allocation8 [shape = 'u8[8192]{0}', space=vmem, size = 0x2000, scoped, tag = 'input window, operand 3, single buffered']
    #allocation9 [shape = 's32[1]{0}', space=sflag, size = 0x4, scoped, tag = 'scoped memory for tpu_custom_call.1']
    #allocation10 [shape = 'u8[8192]{0}', space=vmem, size = 0x2000, scoped, tag = 'output window, operand 0']
    %10 = vsyncpa [#allocation3], 0
    %s11 = scalar_lea.sflag [#allocation3], 1
    %12 = vsyncpa %s11, 0
    %13 = vsyncpa [#allocation6], 0
    %s14 = scalar_lea.sflag [#allocation6], 1
    %15 = vsyncpa %s14, 0
    %16 = vsyncpa [#allocation9], 0
    %17 = vsyncpa [#allocation4], 0
    %s18 = scalar_lea.sflag [#allocation4], 1
    %19 = vsyncpa %s18, 0
    loop: start=0, step=1, limit=6
    $region2: #{tpu_custom_call.1} parent=1 // loop_pre_header
      _
    $region3: #{tpu_custom_call.1} parent=1 // loop_header
      %s21 = sphi 0, %s25
      %p22 = scmp.ge.s32.totalorder %s21, 6
      %s28 = sphi 0, %s40
      %s29 = sphi 0, %s36
      %s30 = sphi 0, %s28
      %s31 = sphi 0, %s29
      %s32 = sphi 0, %s30
      %s33 = sphi 0, %s31
      %s45 = sphi 0, %s47
      %s48 = sphi 0, %s45
      %s49 = sphi 0, %s48
      %s65 = sphi 0, %s49
      %s73 = sphi 0, %s75
      %s76 = sphi 0, %s73
      %s77 = sphi 0, %s76
      %s93 = sphi 0, %s77
      %s97 = sphi 0, %s97
      %s99 = sphi 0, %s97
      %s100 = sphi 0, %s99
      %s114 = sphi 0, %s100
      %s118 = sphi 0, %s118
      %s120 = sphi 0, %s118
      %s121 = sphi 0, %s120
      %s135 = sphi 0, %s121
      %s139 = sphi 0, %s139
      %s141 = sphi 0, %s139
      %s142 = sphi 0, %s141
      %s156 = sphi 0, %s142
      %s164 = sphi 0, %s166
      %s167 = sphi 0, %s164
      %s168 = sphi 0, %s167
      %s184 = sphi 0, %s168
    $region4: #{tpu_custom_call.1} parent=1 // loop_header_branch
      %24 = sbr.rel (%p22) target = $region8
    $region5: #{tpu_custom_call.1} parent=1 // loop_body
      %s26 = ssub.s32 %s21, 1
      %s27 = ssub.s32 %s21, 2
      %s34 = sadd.s32 1, %s29
      %p35 = scmp.ge.s32.totalorder %s34, 2
      %s36 = scalar_select %p35, 0, %s34
      %s37 = sadd.s32 1, %s28
      %s38 = scalar_select %p35, %s37, %s28
      %p39 = scmp.ge.s32.totalorder %s38, 2
      %s40 = scalar_select %p39, 0, %s38
      %s41 = ssub.s32 %s28, %s40
      %s42 = ssub.s32 %s29, %s36
      %s43 = sor.u32 %s41, %s42
      %p44 = scmp.eq.s32.totalorder %s43, 0
      %s46 = sadd.s32 %s45, 1
      %s47 = scalar_select %p44, %s45, %s46
      %p50 = pneg %p44
      %p51 = scmp.eq.s32.totalorder %s21, 3
      %p52 = por %p50, %p51
      %p53 = scmp.ne.s32.totalorder %s45, %s48
      %p54 = scmp.eq.s32.totalorder %s21, 0
      %p55 = por %p53, %p54
      %p56 = scmp.ne.s32.totalorder %s45, %s48
      %p57 = scmp.eq.s32.totalorder %s26, 3
      %p58 = por %p56, %p57
      %p59 = scmp.ne.s32.totalorder %s48, %s49
      %p60 = scmp.eq.s32.totalorder %s26, 0
      %p61 = por %p59, %p60
      %p62 = scmp.ne.s32.totalorder %s48, %s49
      %p63 = scmp.eq.s32.totalorder %s27, 3
      %p64 = por %p62, %p63
      %p66 = scmp.ne.s32.totalorder %s49, %s65
      %p67 = scmp.eq.s32.totalorder %s27, 0
      %p68 = por %p66, %p67
      %s69 = ssub.s32 %s28, %s40
      %s70 = ssub.s32 %s29, %s36
      %s71 = sor.u32 %s69, %s70
      %p72 = scmp.eq.s32.totalorder %s71, 0
      %s74 = sadd.s32 %s73, 1
      %s75 = scalar_select %p72, %s73, %s74
      %p78 = pneg %p72
      %p79 = scmp.eq.s32.totalorder %s21, 3
      %p80 = por %p78, %p79
      %p81 = scmp.ne.s32.totalorder %s73, %s76
      %p82 = scmp.eq.s32.totalorder %s21, 0
      %p83 = por %p81, %p82
      %p84 = scmp.ne.s32.totalorder %s73, %s76
      %p85 = scmp.eq.s32.totalorder %s26, 3
      %p86 = por %p84, %p85
      %p87 = scmp.ne.s32.totalorder %s76, %s77
      %p88 = scmp.eq.s32.totalorder %s26, 0
      %p89 = por %p87, %p88
      %p90 = scmp.ne.s32.totalorder %s76, %s77
      %p91 = scmp.eq.s32.totalorder %s27, 3
      %p92 = por %p90, %p91
      %p94 = scmp.ne.s32.totalorder %s77, %s93
      %p95 = scmp.eq.s32.totalorder %s27, 0
      %p96 = por %p94, %p95
      %s98 = sadd.s32 %s97, 1
      %p101 = scmp.eq.s32.totalorder %s21, 3
      %p102 = scmp.ne.s32.totalorder %s97, %s99
      %p103 = scmp.eq.s32.totalorder %s21, 0
      %p104 = por %p102, %p103
      %p105 = scmp.ne.s32.totalorder %s97, %s99
      %p106 = scmp.eq.s32.totalorder %s26, 3
      %p107 = por %p105, %p106
      %p108 = scmp.ne.s32.totalorder %s99, %s100
      %p109 = scmp.eq.s32.totalorder %s26, 0
      %p110 = por %p108, %p109
      %p111 = scmp.ne.s32.totalorder %s99, %s100
      %p112 = scmp.eq.s32.totalorder %s27, 3
      %p113 = por %p111, %p112
      %p115 = scmp.ne.s32.totalorder %s100, %s114
      %p116 = scmp.eq.s32.totalorder %s27, 0
      %p117 = por %p115, %p116
      %s119 = sadd.s32 %s118, 1
      %p122 = scmp.eq.s32.totalorder %s21, 3
      %p123 = scmp.ne.s32.totalorder %s118, %s120
      %p124 = scmp.eq.s32.totalorder %s21, 0
      %p125 = por %p123, %p124
      %p126 = scmp.ne.s32.totalorder %s118, %s120
      %p127 = scmp.eq.s32.totalorder %s26, 3
      %p128 = por %p126, %p127
      %p129 = scmp.ne.s32.totalorder %s120, %s121
      %p130 = scmp.eq.s32.totalorder %s26, 0
      %p131 = por %p129, %p130
      %p132 = scmp.ne.s32.totalorder %s120, %s121
      %p133 = scmp.eq.s32.totalorder %s27, 3
      %p134 = por %p132, %p133
      %p136 = scmp.ne.s32.totalorder %s121, %s135
      %p137 = scmp.eq.s32.totalorder %s27, 0
      %p138 = por %p136, %p137
      %s140 = sadd.s32 %s139, 1
      %p143 = scmp.eq.s32.totalorder %s21, 3
      %p144 = scmp.ne.s32.totalorder %s139, %s141
      %p145 = scmp.eq.s32.totalorder %s21, 0
      %p146 = por %p144, %p145
      %p147 = scmp.ne.s32.totalorder %s139, %s141
      %p148 = scmp.eq.s32.totalorder %s26, 3
      %p149 = por %p147, %p148
      %p150 = scmp.ne.s32.totalorder %s141, %s142
      %p151 = scmp.eq.s32.totalorder %s26, 0
      %p152 = por %p150, %p151
      %p153 = scmp.ne.s32.totalorder %s141, %s142
      %p154 = scmp.eq.s32.totalorder %s27, 3
      %p155 = por %p153, %p154
      %p157 = scmp.ne.s32.totalorder %s142, %s156
      %p158 = scmp.eq.s32.totalorder %s27, 0
      %p159 = por %p157, %p158
      %s160 = ssub.s32 %s28, %s40
      %s161 = ssub.s32 %s29, %s36
      %s162 = sor.u32 %s160, %s161
      %p163 = scmp.eq.s32.totalorder %s162, 0
      %s165 = sadd.s32 %s164, 1
      %s166 = scalar_select %p163, %s164, %s165
      %p169 = pneg %p163
      %p170 = scmp.eq.s32.totalorder %s21, 3
      %p171 = por %p169, %p170
      %p172 = scmp.ne.s32.totalorder %s164, %s167
      %p173 = scmp.eq.s32.totalorder %s21, 0
      %p174 = por %p172, %p173
      %p175 = scmp.ne.s32.totalorder %s164, %s167
      %p176 = scmp.eq.s32.totalorder %s26, 3
      %p177 = por %p175, %p176
      %p178 = scmp.ne.s32.totalorder %s167, %s168
      %p179 = scmp.eq.s32.totalorder %s26, 0
      %p180 = por %p178, %p179
      %p181 = scmp.ne.s32.totalorder %s167, %s168
      %p182 = scmp.eq.s32.totalorder %s27, 3
      %p183 = por %p181, %p182
      %p185 = scmp.ne.s32.totalorder %s168, %s184
      %p186 = scmp.eq.s32.totalorder %s27, 0
      %p187 = por %p185, %p186
      %p188 = scmp.le.s32.totalorder 1, %s21
      %p189 = scmp.lt.s32.totalorder %s21, 5
      %p190 = pnand %p188, %p189
      %p191 = pneg %p190
      // Predicated region
      $region9: #{tpu_custom_call.1} parent=5 // pred_check
        _
      $region10: #{tpu_custom_call.1} parent=5 // pred_check_branch
        %193 = sbr.rel (%p190) target = $region12
      $region11: #{tpu_custom_call.1} parent=5 // pred_region
        %s194 = ssub.s32 %s21, 1
        // Predicated region
        $region13: #{tpu_custom_call.1} parent=11 // pred_check
          %p195 = pneg %p110
        $region14: #{tpu_custom_call.1} parent=11 // pred_check_branch
          %197 = sbr.rel (%p195) target = $region16
        $region15: #{tpu_custom_call.1} parent=11 // pred_region
          %199 = vsyncadd [#allocation6], 0
          %s201 = sshll.u32 %s2, 4
          %s202 = int_to_ptr.hbm [resolvable:$true] %s201
          %s203 = sshll.u32 [#allocation7], 4
          %s204 = int_to_ptr.vmem [resolvable:$true] %s203
          %206 = dma.hbm_to_vmem [thread:$0]  %s202, 64, %s204, [#allocation6]
        $region16: #{tpu_custom_call.1} parent=11 // pred_fallthru
          _
        // Predicated region
        $region17: #{tpu_custom_call.1} parent=11 // pred_check
          %p207 = pneg %p131
        $region18: #{tpu_custom_call.1} parent=11 // pred_check_branch
          %209 = sbr.rel (%p207) target = $region20
        $region19: #{tpu_custom_call.1} parent=11 // pred_region
          %211 = vsyncadd [#allocation9], 0
          %s212 = sshll.u32 %s3, 4
          %s213 = int_to_ptr.hbm [resolvable:$true] %s212
          %s214 = sshll.u32 [#allocation8], 4
          %s215 = int_to_ptr.vmem [resolvable:$true] %s214
          %220 = dma.hbm_to_vmem [thread:$0]  %s213, 256, %s215, [#allocation9], 128, 128, 8
        $region20: #{tpu_custom_call.1} parent=11 // pred_fallthru
          _
        // Predicated region
        $region21: #{tpu_custom_call.1} parent=11 // pred_check
          %p221 = pneg %p152
        $region22: #{tpu_custom_call.1} parent=11 // pred_check_branch
          %223 = sbr.rel (%p221) target = $region24
        $region23: #{tpu_custom_call.1} parent=11 // pred_region
          _
        $region24: #{tpu_custom_call.1} parent=11 // pred_fallthru
          _
      $region12: #{tpu_custom_call.1} parent=5 // pred_fallthru
        _
      %p224 = scmp.lt.s32.totalorder %s21, 4
      // Predicated region
      $region25: #{tpu_custom_call.1} parent=5 // pred_check
        %p225 = pneg %p224
      $region26: #{tpu_custom_call.1} parent=5 // pred_check_branch
        %227 = sbr.rel (%p225) target = $region28
      $region27: #{tpu_custom_call.1} parent=5 // pred_region
        // Predicated region
        $region29: #{tpu_custom_call.1} parent=27 // pred_check
          %p228 = pneg %p55
        $region30: #{tpu_custom_call.1} parent=27 // pred_check_branch
          %230 = sbr.rel (%p228) target = $region32
        $region31: #{tpu_custom_call.1} parent=27 // pred_region
          %s231 = sand.u32 %s45, 1
          %s232 = scalar_lea.sflag [#allocation3], %s231
          %s233 = sand.u32 %s45, 1
          %s234 = smul.addr %s233, 8
          %s235 = scalar_lea.vmem [#allocation2], %s234
          %237 = vsyncadd %s232, 0
          %s238 = smul.addr %s28, 2
          %s239 = sadd.s32 %s29, %s238
          %s240 = smul.addr %s239, 8
          %s241 = scalar_lea.hbm %s0, %s240
          %s243 = sshll.u32 %s241, 4
          %s244 = int_to_ptr.hbm [resolvable:$true] %s243
          %s245 = sshll.u32 %s235, 4
          %s246 = int_to_ptr.vmem [resolvable:$true] %s245
          %248 = dma.hbm_to_vmem [thread:$0]  %s244, 128, %s246, %s232
        $region32: #{tpu_custom_call.1} parent=27 // pred_fallthru
          _
        // Predicated region
        $region33: #{tpu_custom_call.1} parent=27 // pred_check
          %p249 = pneg %p83
        $region34: #{tpu_custom_call.1} parent=27 // pred_check_branch
          %251 = sbr.rel (%p249) target = $region36
        $region35: #{tpu_custom_call.1} parent=27 // pred_region
          %s252 = sand.u32 %s21, 1
          %s253 = scalar_lea.sflag [#allocation6], %s252
          %s254 = sand.u32 %s73, 1
          %s255 = smul.addr %s254, 16
          %s256 = scalar_lea.vmem [#allocation5], %s255
          %258 = vsyncadd %s253, 0
          %s259 = smul.addr %s29, 2
          %s260 = smul.addr %s28, 4
          %s261 = sadd.s32 %s259, %s260
          %s262 = smul.addr %s261, 8
          %s263 = scalar_lea.hbm %s1, %s262
          %s264 = sshll.u32 %s263, 4
          %s265 = int_to_ptr.hbm [resolvable:$true] %s264
          %s266 = sshll.u32 %s256, 4
          %s267 = int_to_ptr.vmem [resolvable:$true] %s266
          %272 = dma.hbm_to_vmem [thread:$0]  %s265, 256, %s267, %s253, 128, 128, 8
        $region36: #{tpu_custom_call.1} parent=27 // pred_fallthru
          _
      $region28: #{tpu_custom_call.1} parent=5 // pred_fallthru
        _
      %p273 = scmp.le.s32.totalorder 1, %s21
      %p274 = scmp.lt.s32.totalorder %s21, 5
      %p275 = pnand %p273, %p274
      %p276 = pneg %p275
      // Predicated region
      $region37: #{tpu_custom_call.1} parent=5 // pred_check
        _
      $region38: #{tpu_custom_call.1} parent=5 // pred_check_branch
        %278 = sbr.rel (%p275) target = $region40
      $region39: #{tpu_custom_call.1} parent=5 // pred_region
        %s279 = ssub.s32 %s21, 1
        %s280 = sand.u32 %s48, 1
        %s281 = scalar_lea.sflag [#allocation3], %s280
        %s282 = sand.u32 %s48, 1
        %s283 = smul.addr %s282, 8
        %s284 = scalar_lea.vmem [#allocation2], %s283
        // Predicated region
        $region41: #{tpu_custom_call.1} parent=39 // pred_check
          %p285 = pneg %p61
        $region42: #{tpu_custom_call.1} parent=39 // pred_check_branch
          %287 = sbr.rel (%p285) target = $region44
        $region43: #{tpu_custom_call.1} parent=39 // pred_region
          %289 = dma.done %s281, 128
        $region44: #{tpu_custom_call.1} parent=39 // pred_fallthru
          _
        %s290 = sand.u32 %s26, 1
        %s291 = scalar_lea.sflag [#allocation6], %s290
        %s292 = sand.u32 %s76, 1
        %s293 = smul.addr %s292, 16
        %s294 = scalar_lea.vmem [#allocation5], %s293
        // Predicated region
        $region45: #{tpu_custom_call.1} parent=39 // pred_check
          %p295 = pneg %p89
        $region46: #{tpu_custom_call.1} parent=39 // pred_check_branch
          %297 = sbr.rel (%p295) target = $region48
        $region47: #{tpu_custom_call.1} parent=39 // pred_region
          %299 = dma.done %s291, 256
        $region48: #{tpu_custom_call.1} parent=39 // pred_fallthru
          _
        // Predicated region
        $region49: #{tpu_custom_call.1} parent=39 // pred_check
          %p300 = pneg %p110
        $region50: #{tpu_custom_call.1} parent=39 // pred_check_branch
          %302 = sbr.rel (%p300) target = $region52
        $region51: #{tpu_custom_call.1} parent=39 // pred_region
          %304 = dma.done [#allocation6], 64
        $region52: #{tpu_custom_call.1} parent=39 // pred_fallthru
          _
        // Predicated region
        $region53: #{tpu_custom_call.1} parent=39 // pred_check
          %p305 = pneg %p131
        $region54: #{tpu_custom_call.1} parent=39 // pred_check_branch
          %307 = sbr.rel (%p305) target = $region56
        $region55: #{tpu_custom_call.1} parent=39 // pred_region
          %309 = dma.done [#allocation9], 256
        $region56: #{tpu_custom_call.1} parent=39 // pred_fallthru
          _
        %s310 = sand.u32 %s48, 1
        %s311 = scalar_lea.sflag [#allocation3], %s310
        %s312 = sand.u32 %s48, 1
        %s313 = smul.addr %s312, 8
        %s314 = scalar_lea.vmem [#allocation2], %s313
        %p315 = pneg %p61
        %p316 = pneg %p58
        %s317 = sand.u32 %s26, 1
        %s318 = scalar_lea.sflag [#allocation6], %s317
        %s319 = sand.u32 %s76, 1
        %s320 = smul.addr %s319, 16
        %s321 = scalar_lea.vmem [#allocation5], %s320
        %p322 = pneg %p89
        %p323 = pneg %p86
        %p324 = pneg %p110
        %p325 = pneg %p107
        %p326 = pneg %p131
        %p327 = pneg %p128
        %p328 = pneg %p152
        %p329 = pneg %p149
        %p330 = pneg %p180
        %p331 = pneg %p177
        %s332 = sand.u32 %s167, 1
        %s333 = scalar_lea.sflag [#allocation4], %s332
        %s334 = sand.u32 %s167, 1
        %s335 = smul.addr %s334, 8
        %s336 = scalar_lea.vmem [#allocation10], %s335
        %v337 = vld [vmem:[%s284] sm:$0xff]
        %v338 = vxor.u32 %v337, 2147483648
        %v339 = vmul.f32 %v338, 1.442695
        %v340 = vpow.pop %v339
        %v341 = vadd.f32 %v340, 1.0
        %v342 = vrcp.pop %v341
        %v343 = vmul.f32 %v341, %v342
        %v344 = vsub.f32 1.0, %v343
        %v345 = vmul.f32 %v342, %v344
        %v346 = vadd.f32 %v342, %v345
        %vm347 = vweird.f32 %v341
        %vm348 = vweird.f32 %v342
        %vm349 = vmor %vm347, %vm348
        %v350 = vsel %vm349, %v342, %v346
        %v351 = vand.u32 2147483647, %v341
        %vm352 = vcmp.eq.f32.partialorder %v351, 8.507059e+37
        %v353 = vand.u32 %v341, 2147483648
        %v354 = vor.u32 1.1754944e-38, %v353
        %v355 = vsel %vm352, %v354, %v350
        %v356 = vmul.f32 1.0, %v355
        %358 = vrot.lane.b32.xlu0 %v356, 112
        %v359 = vpop.permute.xlu0 %358
        %v361 = vmul.f32 %v337, %v359
        %v362 = vld [vmem:[#allocation7] sm:$0x7]
        %v363 = vld [vmem:[%s294] sm:$0xff]
        %v364 = vld [vmem:[%s294 + $0x8] sm:$0xff]
        %v365 = vxor.u32 %v363, 2147483648
        %v366 = vxor.u32 %v364, 2147483648
        %v367 = vmul.f32 %v365, 1.442695
        %v368 = vpow.pop %v367
        %v369 = vmul.f32 %v366, 1.442695
        %v370 = vpow.pop %v369
        %v371 = vadd.f32 %v368, 1.0
        %v372 = vadd.f32 %v370, 1.0
        %v373 = vrcp.pop %v371
        %v374 = vmul.f32 %v371, %v373
        %v375 = vsub.f32 1.0, %v374
        %v376 = vmul.f32 %v373, %v375
        %v377 = vadd.f32 %v373, %v376
        %vm378 = vweird.f32 %v371
        %vm379 = vweird.f32 %v373
        %vm380 = vmor %vm378, %vm379
        %v381 = vsel %vm380, %v373, %v377
        %v382 = vand.u32 2147483647, %v371
        %vm383 = vcmp.eq.f32.partialorder %v382, 8.507059e+37
        %v384 = vand.u32 %v371, 2147483648
        %v385 = vor.u32 1.1754944e-38, %v384
        %v386 = vsel %vm383, %v385, %v381
        %v387 = vmul.f32 1.0, %v386
        %v388 = vrcp.pop %v372
        %v389 = vmul.f32 %v372, %v388
        %v390 = vsub.f32 1.0, %v389
        %v391 = vmul.f32 %v388, %v390
        %v392 = vadd.f32 %v388, %v391
        %vm393 = vweird.f32 %v372
        %vm394 = vweird.f32 %v388
        %vm395 = vmor %vm393, %vm394
        %v396 = vsel %vm395, %v388, %v392
        %v397 = vand.u32 2147483647, %v372
        %vm398 = vcmp.eq.f32.partialorder %v397, 8.507059e+37
        %v399 = vand.u32 %v372, 2147483648
        %v400 = vor.u32 1.1754944e-38, %v399
        %v401 = vsel %vm398, %v400, %v396
        %v402 = vmul.f32 1.0, %v401
        %405 = vrot.lane.b32.xlu0 %v387, 112
        %v406 = vpop.permute.xlu0 %405
        %407 = vrot.lane.b32.xlu0 %v402, 112
        %v408 = vpop.permute.xlu0 %407
        %v411 = vmul.f32 %v363, %v406
        %v412 = vmul.f32 %v364, %v408
        %v413 = vperm.slane %v362, 0
        %v414 = vmul.f32 %v411, %v413
        %v415 = vmul.f32 %v361, %v413
        %v416 = vperm.slane %v362, 1
        %v417 = vmul.f32 %v361, %v416
        %v419 = vrot.slane %v417, 1
        %v421 = vadd.f32 %v414, %v419
        %v422 = vadd.f32 %v415, %v419
        %v423 = vperm.slane %v362, 2
        %v424 = vmul.f32 %v361, %v423
        %v425 = vmul.f32 %v412, %v423
        %vm428 = vcmask 1045504
        %v429 = vrot.slane %v424, 2
        %v430 = vrot.slane %v425, 2
        %v431 = vsel %vm428, %v429, %v430
        %v434 = vadd.f32 %v421, %v429
        %v435 = vadd.f32 %v422, %v431
        %v436 = vld [vmem:[#allocation8] sm:$0xff]
        %v437 = vld [vmem:[#allocation8 + $0x8] sm:$0xff]
        %v438 = vld [vmem:[%s4] sm:$0x1]
        %v440 = vperm.slane %v438, 0
        %vm444 = vcmask 1040384
        %v445 = vrot.slane %v434, 7
        %v446 = vrot.slane %v435, 7
        %v447 = vsel %vm444, %v445, %v446
        %vm448 = vcmask 130048
        %v449 = vsel %vm448, %v447, 0
        %451 = vmatpush.msra.mxu0 0.0
        %452 = vmatpush.msra.mxu0 0.0
        %453 = vmatpush.msra.mxu0 0.0
        %454 = vmatpush.msra.mxu0 0.0
        %455 = vmatpush.msra.mxu0 0.0
        %456 = vmatpush.msra.mxu0 0.0
        %457 = vmatpush.msra.mxu0 0.0
        %458 = vmatpush.msra.mxu0 0.0
        %459 = vmatpush.msra.mxu0 0.0
        %460 = vmatpush.msra.mxu0 0.0
        %461 = vmatpush.msra.mxu0 0.0
        %462 = vmatpush.msra.mxu0 0.0
        %463 = vmatpush.msra.mxu0 0.0
        %464 = vmatpush.msra.mxu0 0.0
        %465 = vmatpush.msra.mxu0 %v437
        %466 = vmatpush.msra.mxu0 %v436
        %467 = vmatmul.f32.gmra.mxu0 %v449
        %v468 = vpop.f32.mrf.mxu0
        %v469 = vadd.f32 %v440, %v468
        %470 = vdwg.mxu0
        %471 = vst.msk [vmem:[%s336] sm:$0xff] %vm448, %v469
        %s472 = sand.u32 %s167, 1
        %s473 = scalar_lea.sflag [#allocation4], %s472
        %s474 = sand.u32 %s167, 1
        %s475 = smul.addr %s474, 8
        %s476 = scalar_lea.vmem [#allocation10], %s475
        // Predicated region
        $region57: #{tpu_custom_call.1} parent=39 // pred_check
          %p477 = pneg %p177
        $region58: #{tpu_custom_call.1} parent=39 // pred_check_branch
          %479 = sbr.rel (%p477) target = $region60
        $region59: #{tpu_custom_call.1} parent=39 // pred_region
          %481 = vsyncadd %s473, 0
          %s482 = smul.addr %s30, 2
          %s483 = sadd.s32 %s31, %s482
          %s484 = smul.addr %s483, 8
          %s485 = scalar_lea.hbm %s5, %s484
          %s487 = sshll.u32 %s476, 4
          %s488 = int_to_ptr.vmem [resolvable:$true] %s487
          %s489 = sshll.u32 %s485, 4
          %s490 = int_to_ptr.hbm [resolvable:$true] %s489
          %492 = dma.vmem_to_hbm [thread:$0]  %s488, 128, %s490, %s473
        $region60: #{tpu_custom_call.1} parent=39 // pred_fallthru
          _
      $region40: #{tpu_custom_call.1} parent=5 // pred_fallthru
        _
      %p493 = scmp.le.s32.totalorder 2, %s21
      // Predicated region
      $region61: #{tpu_custom_call.1} parent=5 // pred_check
        %p494 = pneg %p493
      $region62: #{tpu_custom_call.1} parent=5 // pred_check_branch
        %496 = sbr.rel (%p494) target = $region64
      $region63: #{tpu_custom_call.1} parent=5 // pred_region
        %s497 = ssub.s32 %s21, 2
        // Predicated region
        $region65: #{tpu_custom_call.1} parent=63 // pred_check
          %p498 = pneg %p183
        $region66: #{tpu_custom_call.1} parent=63 // pred_check_branch
          %500 = sbr.rel (%p498) target = $region68
        $region67: #{tpu_custom_call.1} parent=63 // pred_region
          %s501 = sand.u32 %s168, 1
          %s502 = scalar_lea.sflag [#allocation4], %s501
          %s503 = sand.u32 %s168, 1
          %s504 = smul.addr %s503, 8
          %s505 = scalar_lea.vmem [#allocation10], %s504
          %507 = dma.done %s502, 128
        $region68: #{tpu_custom_call.1} parent=63 // pred_fallthru
          _
      $region64: #{tpu_custom_call.1} parent=5 // pred_fallthru
        _
    $region6: #{tpu_custom_call.1} parent=1 // loop_footer
      %s25 = sadd.s32 1, %s21
    $region7: #{tpu_custom_call.1} parent=1 // loop_footer_branch
      %20 = sbr.rel target = $region3
    $region8: #{tpu_custom_call.1} parent=1 // loop_exit
      _
    %508 = vsyncpa [#allocation3], 1
    %s509 = scalar_lea.sflag [#allocation3], 1
    %510 = vsyncpa %s509, 1
    %511 = vsyncpa [#allocation6], 1
    %s512 = scalar_lea.sflag [#allocation6], 1
    %513 = vsyncpa %s512, 1
    %514 = vsyncpa [#allocation9], 1
    %515 = vsyncpa [#allocation4], 1
    %s516 = scalar_lea.sflag [#allocation4], 1
    %517 = vsyncpa %s516, 1

</llo_original>
